<compile_context>
chip_gen: v6e
topology: v6e:2x2x1
jax: 0.10.0
libtpu: 0.0.40
codegen_flags: <defaults>
</compile_context>

<pallas_src>
import math

import jax
import jax.numpy as jnp
import numpy as np
from jax import lax
from jax.experimental import pallas as pl
from jax.experimental.pallas import tpu as pltpu


def _round_up(x, m):
    return (x + m - 1) // m * m


# ---------------------------------------------------------------------------
# Kernel 1: fused Q/K/V projection.  One MXU dot against the concatenated
# weight [Wq*scale | Wk | Wv_aug]; outputs are written in the exact layouts the
# attention kernel consumes (Q/K: [tile, H*d], V: [tile, H*(d+1)] ones-augmented).
# ---------------------------------------------------------------------------
def _make_qkv_proj_kernel(dq, dk, dv_tot):
    def kernel(x_ref, w_ref, b_ref, q_ref, k_ref, v_ref):
        y = jnp.dot(x_ref[...], w_ref[...], preferred_element_type=jnp.float32) + b_ref[...]
        q_ref[...] = y[:, :dq]
        k_ref[...] = y[:, dq:dq + dk]
        v_ref[...] = y[:, dq + dk:dq + dk + dv_tot]
    return kernel


# ---------------------------------------------------------------------------
# Kernel 2: tiled masked attention, all heads in-kernel.
#   grid = (dst_tiles, src_tiles); src is the reduction (innermost) axis.
#   Per head: S = Q_h K_h^T ; score = exp(clip(S)) * adj ; score @ [V_h | 1]
#   accumulates both wV and Z in one MXU matmul into a [tile_dst, H*(d+1)]
#   VMEM accumulator; finalize normalizes and stores a lane-dense
#   [tile_dst, H*d] block.
# ---------------------------------------------------------------------------
def _make_attn_kernel(num_heads, d, n_j):
    dv = d + 1

    def kernel(counts_ref, jeff_ref,            # scalar prefetch (SMEM, int32)
               q_ref, k_ref, v_ref, adj_ref,    # VMEM input tiles
               out_ref,                         # [tile_dst, H*d] output block
               acc_ref):                        # [tile_dst, H*(d+1)] VMEM scratch
        i = pl.program_id(0)
        j = pl.program_id(1)

        @pl.when(j == 0)
        def _init():
            acc_ref[...] = jnp.zeros_like(acc_ref)

        # Block sparsity: skip all compute for adjacency tiles containing no edges.
        @pl.when(counts_ref[i * n_j + j] > 0)
        def _compute():
            q = q_ref[...]                               # [Td, H*d] (Q already /sqrt(d))
            k = k_ref[...]                               # [Ts, H*d]
            v = v_ref[...]                               # [Ts, H*(d+1)] ones-augmented
            adj = adj_ref[...].astype(jnp.float32)       # int8 -> f32, once per tile
            parts = []
            for h in range(num_heads):                   # static unroll, H is small
                q_h = q[:, h * d:(h + 1) * d]            # [Td, d]
                k_h = k[:, h * d:(h + 1) * d]            # [Ts, d]
                v_h = v[:, h * dv:(h + 1) * dv]          # [Ts, d+1]
                s = lax.dot_general(q_h, k_h, (((1,), (1,)), ((), ())),
                                    preferred_element_type=jnp.float32)   # [Td, Ts]
                score = jnp.exp(jnp.clip(s, -5.0, 5.0)) * adj
                # One matmul yields both wV (cols :d) and Z (col d).
                parts.append(jnp.dot(score, v_h, preferred_element_type=jnp.float32))
            acc_ref[...] += jnp.concatenate(parts, axis=-1)

        @pl.when(j == n_j - 1)
        def _finalize():
            acc = acc_ref[...]
            outs = []
            for h in range(num_heads):
                wv = acc[:, h * dv:h * dv + d]
                z = acc[:, h * dv + d:(h + 1) * dv] + 1e-6
                inv = pl.reciprocal(z, approx=True)      # EUP slot
                inv = inv * (2.0 - z * inv)              # one Newton step -> f32-accurate
                outs.append(wv * inv)
            out_ref[...] = jnp.concatenate(outs, axis=-1).astype(out_ref.dtype)

    return kernel


# ---------------------------------------------------------------------------
# Wrapper: padding, adjacency / per-tile counts, DMA-dedup index maps, pallas_calls.
# ---------------------------------------------------------------------------
def etransformer_forward(x, edge_index, wq, bq, wk, bk, wv, bv, *, num_heads,
                         tile_dst=256, tile_src=256):
    N, in_dim = x.shape
    dout = wq.shape[1]
    assert dout % num_heads == 0, "out_dim must be divisible by num_heads"
    d = dout // num_heads
    H = num_heads
    dv = d + 1

    # ---- tiling / padding ----------------------------------------------------
    n128 = _round_up(N, 128)
    tile_dst = min(tile_dst, n128)
    tile_src = min(tile_src, n128)
    n_pad = _round_up(n128, math.lcm(tile_dst, tile_src))
    n_i = n_pad // tile_dst
    n_j = n_pad // tile_src

    x_pad = jnp.pad(x.astype(jnp.float32), ((0, n_pad - N), (0, 0)))

    # ---- concatenated projection weights --------------------------------------
    # Fold 1/sqrt(d) into W_Q / b_Q; augment W_V/b_V with a per-head ones column
    # (zero weight column + bias 1.0) so x @ Wv_aug + bv_aug = [V_h | 1] per head.
    scale = 1.0 / math.sqrt(d)
    wq_s = wq.astype(jnp.float32) * scale
    bq_s = bq.astype(jnp.float32) * scale
    wv_aug = jnp.concatenate(
        [wv.astype(jnp.float32).reshape(in_dim, H, d),
         jnp.zeros((in_dim, H, 1), jnp.float32)], axis=-1).reshape(in_dim, H * dv)
    bv_aug = jnp.concatenate(
        [bv.astype(jnp.float32).reshape(H, d),
         jnp.ones((H, 1), jnp.float32)], axis=-1).reshape(H * dv)
    w_all = jnp.concatenate([wq_s, wk.astype(jnp.float32), wv_aug], axis=1)
    b_all = jnp.concatenate([bq_s, bk.astype(jnp.float32), bv_aug]).reshape(1, -1)
    p_tot = w_all.shape[1]

    # ---- Q/K/V projections (one tiled pallas_call, one dot) -------------------
    row = lambda i: (i, 0)
    full = lambda i: (0, 0)
    q_flat, k_flat, v_flat = pl.pallas_call(
        _make_qkv_proj_kernel(dout, dout, H * dv),
        out_shape=[jax.ShapeDtypeStruct((n_pad, dout), jnp.float32),
                   jax.ShapeDtypeStruct((n_pad, dout), jnp.float32),
                   jax.ShapeDtypeStruct((n_pad, H * dv), jnp.float32)],
        grid=(n_pad // tile_dst,),
        in_specs=[
            pl.BlockSpec((tile_dst, in_dim), row),
            pl.BlockSpec((in_dim, p_tot), full),
            pl.BlockSpec((1, p_tot), full),
        ],
        out_specs=[pl.BlockSpec((tile_dst, dout), row),
                   pl.BlockSpec((tile_dst, dout), row),
                   pl.BlockSpec((tile_dst, H * dv), row)],
        compiler_params=pltpu.CompilerParams(dimension_semantics=("parallel",)),
    )(x_pad, w_all, b_all)

    # ---- dense edge-multiplicity adjacency (int8) + per-tile edge counts ------
    # int8 represents multiplicities exactly up to 127 (fine for simple graphs).
    src = edge_index[0].astype(jnp.int32)
    dst = edge_index[1].astype(jnp.int32)
    adj = (jnp.zeros((n_pad, n_pad), jnp.int32)
           .at[dst, src].add(1)).astype(jnp.int8)
    counts2d = (jnp.zeros((n_i, n_j), jnp.int32)
                .at[dst // tile_dst, src // tile_src].add(1))
    counts = counts2d.reshape(-1)
    # DMA dedup for empty tiles: j_eff[i, j] = last non-empty src-tile index <= j
    # (or 0).  Empty tiles reuse the previous block index, so no new K/V/adj DMA
    # is issued for them (their compute is gated off by `counts` anyway).
    jidx = jnp.broadcast_to(jnp.arange(n_j, dtype=jnp.int32)[None, :], (n_i, n_j))
    marked = jnp.where(counts2d > 0, jidx, jnp.int32(-1))
    j_eff = jnp.maximum(lax.cummax(marked, axis=1), 0).astype(jnp.int32).reshape(-1)
    # TODO(synk): for very sparse graphs, drive j from a compacted per-dst-tile
    # list of non-empty src tiles so empty grid steps are not even iterated.

    grid_spec = pltpu.PrefetchScalarGridSpec(
        num_scalar_prefetch=2,
        grid=(n_i, n_j),
        in_specs=[
            pl.BlockSpec((tile_dst, dout), lambda i, j, c, je: (i, 0)),                  # Q
            pl.BlockSpec((tile_src, dout), lambda i, j, c, je: (je[i * n_j + j], 0)),    # K
            pl.BlockSpec((tile_src, H * dv), lambda i, j, c, je: (je[i * n_j + j], 0)),  # V_aug
            pl.BlockSpec((tile_dst, tile_src), lambda i, j, c, je: (i, je[i * n_j + j])),# adj
        ],
        out_specs=pl.BlockSpec((tile_dst, dout), lambda i, j, c, je: (i, 0)),
        scratch_shapes=[pltpu.VMEM((tile_dst, H * dv), jnp.float32)],   # [wV | Z] accumulator
    )

    out = pl.pallas_call(
        _make_attn_kernel(H, d, n_j),
        out_shape=jax.ShapeDtypeStruct((n_pad, dout), jnp.float32),
        grid_spec=grid_spec,
        compiler_params=pltpu.CompilerParams(
            dimension_semantics=("parallel", "arbitrary"),
            vmem_limit_bytes=32 * 1024 * 1024),
    )(counts, j_eff, q_flat, k_flat, v_flat, adj)

    return out[:N]


# ---------------------------------------------------------------------------
# Pure-JAX port of the PyTorch edge-list / scatter formulation (reference).
# ---------------------------------------------------------------------------
def etransformer_reference(x, edge_index, wq, bq, wk, bk, wv, bv, *, num_heads):
    N = x.shape[0]
    dout = wq.shape[1]
    d = dout // num_heads
    Q = (x @ wq + bq).reshape(N, num_heads, d)
    K = (x @ wk + bk).reshape(N, num_heads, d)
    V = (x @ wv + bv).reshape(N, num_heads, d)
    src, dst = edge_index[0], edge_index[1]
    score = (K[src] * Q[dst]) / np.sqrt(d)                              # [E, H, d]
    score = jnp.exp(jnp.clip(score.sum(-1, keepdims=True), -5.0, 5.0))  # [E, H, 1]
    msg = V[src] * score                                                # [E, H, d]
    wV = jnp.zeros_like(V).at[dst].add(msg)
    Z = jnp.zeros((N, num_heads, 1), jnp.float32).at[dst].add(score)
    h_out = wV / (Z + 1e-6)
    return h_out.reshape(N, dout)


if __name__ == "__main__":
    # Small shapes consistent with the module's forward.
    N = 200          # number of nodes (non-multiple of 128 to exercise padding)
    in_dim = 32
    out_dim = 32     # total hidden (= num_heads * per-head dim)
    num_heads = 4
    num_edges = 600

    key = jax.random.PRNGKey(0)
    kx, kq, kk, kv, kbq, kbk, kbv, ks, kd = jax.random.split(key, 9)

    x = jax.random.normal(kx, (N, in_dim), jnp.float32)

    bound = 1.0 / math.sqrt(in_dim)
    wq = jax.random.uniform(kq, (in_dim, out_dim), jnp.float32, -bound, bound)
    wk = jax.random.uniform(kk, (in_dim, out_dim), jnp.float32, -bound, bound)
    wv = jax.random.uniform(kv, (in_dim, out_dim), jnp.float32, -bound, bound)
    bq = jax.random.uniform(kbq, (out_dim,), jnp.float32, -bound, bound)
    bk = jax.random.uniform(kbk, (out_dim,), jnp.float32, -bound, bound)
    bv = jax.random.uniform(kbv, (out_dim,), jnp.float32, -bound, bound)

    # Directed edge list [2, E] = [src; dst].  Sources restricted to the first
    # 100 nodes so some adjacency tiles are all-zero and the scalar-prefetch
    # compute-skip + DMA-dedup paths are exercised.
    src = jax.random.randint(ks, (num_edges,), 0, 100, jnp.int32)
    dst = jax.random.randint(kd, (num_edges,), 0, N, jnp.int32)
    edge_index = jnp.stack([src, dst])

    out = etransformer_forward(x, edge_index, wq, bq, wk, bk, wv, bv,
                               num_heads=num_heads, tile_dst=128, tile_src=128)
    out = jax.block_until_ready(out)

    ref = etransformer_reference(x, edge_index, wq, bq, wk, bk, wv, bv,
                                 num_heads=num_heads)
    np.testing.assert_allclose(np.asarray(out), np.asarray(ref),
                               rtol=1e-4, atol=1e-4)

    # TODO(synk): use_edge_attr=True branch (per-edge E projection) not implemented.
    print("KERNEL_OK")
</pallas_src>

<mosaic_0001>
module attributes {stable_mosaic.version = 11 : i64} {
  func.func @kernel(%arg0: i32, %arg1: memref<128x32xf32, #tpu.memory_space<vmem>>, %arg2: memref<32x100xf32, #tpu.memory_space<vmem>>, %arg3: memref<1x100xf32, #tpu.memory_space<vmem>>, %arg4: memref<128x32xf32, #tpu.memory_space<vmem>>, %arg5: memref<128x32xf32, #tpu.memory_space<vmem>>, %arg6: memref<128x36xf32, #tpu.memory_space<vmem>>) attributes {dimension_semantics = [#tpu.dimension_semantics<parallel>], iteration_bounds = array<i64: 2>, scalar_prefetch = 0 : i64, scratch_operands = 0 : i64, tpu.core_type = #tpu.core_type<tc>, window_params = [{transform_indices = @transform_0, window_bounds = array<i64: 128, 32>}, {pipeline_mode = #tpu.pipeline_mode<synchronous>, transform_indices = @transform_1, window_bounds = array<i64: 32, 100>}, {pipeline_mode = #tpu.pipeline_mode<synchronous>, transform_indices = @transform_2, window_bounds = array<i64: 1, 100>}, {transform_indices = @transform_3, window_bounds = array<i64: 128, 32>}, {transform_indices = @transform_4, window_bounds = array<i64: 128, 32>}, {transform_indices = @transform_5, window_bounds = array<i64: 128, 36>}]} {
    %c0 = arith.constant 0 : index
    %c0_0 = arith.constant 0 : index
    %0 = vector.load %arg1[%c0, %c0_0] : memref<128x32xf32, #tpu.memory_space<vmem>>, vector<128x32xf32>
    %c0_1 = arith.constant 0 : index
    %c0_2 = arith.constant 0 : index
    %1 = vector.load %arg2[%c0_1, %c0_2] : memref<32x100xf32, #tpu.memory_space<vmem>>, vector<32x100xf32>
    %cst = arith.constant dense<0.000000e+00> : vector<128x100xf32>
    %2 = tpu.matmul %0, %1, %cst {dimension_numbers = #tpu.dot_dimension_numbers<[1], [0], [0], [1], [0, 0, 1, 1], [], []>} : vector<128x32xf32>, vector<32x100xf32>, vector<128x100xf32> -> vector<128x100xf32>
    %c0_3 = arith.constant 0 : index
    %c0_4 = arith.constant 0 : index
    %3 = vector.load %arg3[%c0_3, %c0_4] : memref<1x100xf32, #tpu.memory_space<vmem>>, vector<1x100xf32>
    %4 = vector.broadcast %3 : vector<1x100xf32> to vector<128x100xf32>
    %5 = arith.addf %2, %4 : vector<128x100xf32>
    %6 = vector.extract_strided_slice %5 {offsets = [0, 0], sizes = [128, 32], strides = [1, 1]} : vector<128x100xf32> to vector<128x32xf32>
    %c0_5 = arith.constant 0 : index
    %c0_6 = arith.constant 0 : index
    %7 = vector.load %arg4[%c0_5, %c0_6] : memref<128x32xf32, #tpu.memory_space<vmem>>, vector<128x32xf32>
    tpu.vector_store %arg4[%c0_5, %c0_6], %6 {strides = array<i32>} : memref<128x32xf32, #tpu.memory_space<vmem>>, vector<128x32xf32>,
    %8 = vector.extract_strided_slice %5 {offsets = [0, 32], sizes = [128, 32], strides = [1, 1]} : vector<128x100xf32> to vector<128x32xf32>
    %c0_7 = arith.constant 0 : index
    %c0_8 = arith.constant 0 : index
    %9 = vector.load %arg5[%c0_7, %c0_8] : memref<128x32xf32, #tpu.memory_space<vmem>>, vector<128x32xf32>
    tpu.vector_store %arg5[%c0_7, %c0_8], %8 {strides = array<i32>} : memref<128x32xf32, #tpu.memory_space<vmem>>, vector<128x32xf32>,
    %10 = vector.extract_strided_slice %5 {offsets = [0, 64], sizes = [128, 36], strides = [1, 1]} : vector<128x100xf32> to vector<128x36xf32>
    %c0_9 = arith.constant 0 : index
    %c0_10 = arith.constant 0 : index
    %11 = vector.load %arg6[%c0_9, %c0_10] : memref<128x36xf32, #tpu.memory_space<vmem>>, vector<128x36xf32>
    tpu.vector_store %arg6[%c0_9, %c0_10], %10 {strides = array<i32>} : memref<128x36xf32, #tpu.memory_space<vmem>>, vector<128x36xf32>,
    return
  }
  func.func @transform_0(%arg0: i32) -> (i32, i32) {
    %c0_i32 = arith.constant 0 : i32
    %c0_i32_0 = arith.constant 0 : i32
    return %arg0, %c0_i32 : i32, i32
  }
  func.func @transform_1(%arg0: i32) -> (i32, i32) {
    %c0_i32 = arith.constant 0 : i32
    %c0_i32_0 = arith.constant 0 : i32
    %c0_i32_1 = arith.constant 0 : i32
    return %c0_i32, %c0_i32_0 : i32, i32
  }
  func.func @transform_2(%arg0: i32) -> (i32, i32) {
    %c0_i32 = arith.constant 0 : i32
    %c0_i32_0 = arith.constant 0 : i32
    %c0_i32_1 = arith.constant 0 : i32
    return %c0_i32, %c0_i32_0 : i32, i32
  }
  func.func @transform_3(%arg0: i32) -> (i32, i32) {
    %c0_i32 = arith.constant 0 : i32
    %c0_i32_0 = arith.constant 0 : i32
    return %arg0, %c0_i32 : i32, i32
  }
  func.func @transform_4(%arg0: i32) -> (i32, i32) {
    %c0_i32 = arith.constant 0 : i32
    %c0_i32_0 = arith.constant 0 : i32
    return %arg0, %c0_i32 : i32, i32
  }
  func.func @transform_5(%arg0: i32) -> (i32, i32) {
    %c0_i32 = arith.constant 0 : i32
    %c0_i32_0 = arith.constant 0 : i32
    return %arg0, %c0_i32 : i32, i32
  }
}

</mosaic_0001>

<llo_original>
// kernel: tpu_custom_call.1
$region0: #{tpu_custom_call.1}
  #allocation0 [shape = 'u32[]', space=smem, size = 0x4, offset = 0x4, fixed_abs, tag = 'smem constant byte address 0x4 - core index']
  #allocation1 [shape = 'u32[144,128]{1,0:T(1,128)}', space=vmem, size = 0x12000, scoped, tag = 'internal scratch']
  %s0 = inlined_call_operand.vmem [shape: f32[256,32], index: 0, kind: input, shape index: {}]
  %s1 = inlined_call_operand.vmem [shape: f32[32,100], index: 1, kind: input, shape index: {}]
  %s2 = inlined_call_operand.vmem [shape: f32[1,100], index: 2, kind: input, shape index: {}]
  %s3 = inlined_call_operand.vmem [shape: f32[256,32], index: 3, kind: output, shape index: {0}]
  %s4 = inlined_call_operand.vmem [shape: f32[256,32], index: 4, kind: output, shape index: {1}]
  %s5 = inlined_call_operand.vmem [shape: f32[256,36], index: 5, kind: output, shape index: {2}]
  %6 = xla_tuple %s3, %s4, %s5
  %s7 = sld [smem:[#allocation0]]
  $region61: #{tpu_custom_call.1} parent=0
    _
  %s9 = ssub.s32 1, %s7
  %s10 = scalar_select 0, %s9, %s7
  loop: start=0, step=1, limit=4
  $region2: #{tpu_custom_call.1} parent=0 // loop_pre_header
    _
  $region3: #{tpu_custom_call.1} parent=0 // loop_header
    %s12 = sphi 0, %s16
    %p13 = scmp.ge.s32.totalorder %s12, 4
    %s22 = sphi 0, %s24
    %s25 = sphi 0, %s22
    %s26 = sphi 0, %s25
    %s42 = sphi 0, %s26
    %s46 = sphi 0, %s46
    %s48 = sphi 0, %s46
    %s49 = sphi 0, %s48
    %s63 = sphi 0, %s49
    %s67 = sphi 0, %s67
    %s69 = sphi 0, %s67
    %s70 = sphi 0, %s69
    %s84 = sphi 0, %s70
    %s90 = sphi 0, %s92
    %s93 = sphi 0, %s90
    %s94 = sphi 0, %s93
    %s110 = sphi 0, %s94
    %s116 = sphi 0, %s118
    %s119 = sphi 0, %s116
    %s120 = sphi 0, %s119
    %s136 = sphi 0, %s120
    %s142 = sphi 0, %s144
    %s145 = sphi 0, %s142
    %s146 = sphi 0, %s145
    %s162 = sphi 0, %s146
  $region4: #{tpu_custom_call.1} parent=0 // loop_header_branch
    %15 = sbr.rel (%p13) target = $region8
  $region5: #{tpu_custom_call.1} parent=0 // loop_body
    %s17 = ssub.s32 %s12, 1
    %s18 = ssub.s32 %s12, 2
    %s19 = sadd.s32 %s12, 1
    %s20 = ssub.s32 %s12, %s19
    %p21 = scmp.eq.s32.totalorder %s20, 0
    %s23 = sadd.s32 %s22, 1
    %s24 = scalar_select %p21, %s22, %s23
    %p27 = pneg %p21
    %p28 = scmp.eq.s32.totalorder %s12, 1
    %p29 = por %p27, %p28
    %p30 = scmp.ne.s32.totalorder %s22, %s25
    %p31 = scmp.eq.s32.totalorder %s12, 0
    %p32 = por %p30, %p31
    %p33 = scmp.ne.s32.totalorder %s22, %s25
    %p34 = scmp.eq.s32.totalorder %s17, 1
    %p35 = por %p33, %p34
    %p36 = scmp.ne.s32.totalorder %s25, %s26
    %p37 = scmp.eq.s32.totalorder %s17, 0
    %p38 = por %p36, %p37
    %p39 = scmp.ne.s32.totalorder %s25, %s26
    %p40 = scmp.eq.s32.totalorder %s18, 1
    %p41 = por %p39, %p40
    %p43 = scmp.ne.s32.totalorder %s26, %s42
    %p44 = scmp.eq.s32.totalorder %s18, 0
    %p45 = por %p43, %p44
    %s47 = sadd.s32 %s46, 1
    %p50 = scmp.eq.s32.totalorder %s12, 1
    %p51 = scmp.ne.s32.totalorder %s46, %s48
    %p52 = scmp.eq.s32.totalorder %s12, 0
    %p53 = por %p51, %p52
    %p54 = scmp.ne.s32.totalorder %s46, %s48
    %p55 = scmp.eq.s32.totalorder %s17, 1
    %p56 = por %p54, %p55
    %p57 = scmp.ne.s32.totalorder %s48, %s49
    %p58 = scmp.eq.s32.totalorder %s17, 0
    %p59 = por %p57, %p58
    %p60 = scmp.ne.s32.totalorder %s48, %s49
    %p61 = scmp.eq.s32.totalorder %s18, 1
    %p62 = por %p60, %p61
    %p64 = scmp.ne.s32.totalorder %s49, %s63
    %p65 = scmp.eq.s32.totalorder %s18, 0
    %p66 = por %p64, %p65
    %s68 = sadd.s32 %s67, 1
    %p71 = scmp.eq.s32.totalorder %s12, 1
    %p72 = scmp.ne.s32.totalorder %s67, %s69
    %p73 = scmp.eq.s32.totalorder %s12, 0
    %p74 = por %p72, %p73
    %p75 = scmp.ne.s32.totalorder %s67, %s69
    %p76 = scmp.eq.s32.totalorder %s17, 1
    %p77 = por %p75, %p76
    %p78 = scmp.ne.s32.totalorder %s69, %s70
    %p79 = scmp.eq.s32.totalorder %s17, 0
    %p80 = por %p78, %p79
    %p81 = scmp.ne.s32.totalorder %s69, %s70
    %p82 = scmp.eq.s32.totalorder %s18, 1
    %p83 = por %p81, %p82
    %p85 = scmp.ne.s32.totalorder %s70, %s84
    %p86 = scmp.eq.s32.totalorder %s18, 0
    %p87 = por %p85, %p86
    %s88 = ssub.s32 %s12, %s19
    %p89 = scmp.eq.s32.totalorder %s88, 0
    %s91 = sadd.s32 %s90, 1
    %s92 = scalar_select %p89, %s90, %s91
    %p95 = pneg %p89
    %p96 = scmp.eq.s32.totalorder %s12, 1
    %p97 = por %p95, %p96
    %p98 = scmp.ne.s32.totalorder %s90, %s93
    %p99 = scmp.eq.s32.totalorder %s12, 0
    %p100 = por %p98, %p99
    %p101 = scmp.ne.s32.totalorder %s90, %s93
    %p102 = scmp.eq.s32.totalorder %s17, 1
    %p103 = por %p101, %p102
    %p104 = scmp.ne.s32.totalorder %s93, %s94
    %p105 = scmp.eq.s32.totalorder %s17, 0
    %p106 = por %p104, %p105
    %p107 = scmp.ne.s32.totalorder %s93, %s94
    %p108 = scmp.eq.s32.totalorder %s18, 1
    %p109 = por %p107, %p108
    %p111 = scmp.ne.s32.totalorder %s94, %s110
    %p112 = scmp.eq.s32.totalorder %s18, 0
    %p113 = por %p111, %p112
    %s114 = ssub.s32 %s12, %s19
    %p115 = scmp.eq.s32.totalorder %s114, 0
    %s117 = sadd.s32 %s116, 1
    %s118 = scalar_select %p115, %s116, %s117
    %p121 = pneg %p115
    %p122 = scmp.eq.s32.totalorder %s12, 1
    %p123 = por %p121, %p122
    %p124 = scmp.ne.s32.totalorder %s116, %s119
    %p125 = scmp.eq.s32.totalorder %s12, 0
    %p126 = por %p124, %p125
    %p127 = scmp.ne.s32.totalorder %s116, %s119
    %p128 = scmp.eq.s32.totalorder %s17, 1
    %p129 = por %p127, %p128
    %p130 = scmp.ne.s32.totalorder %s119, %s120
    %p131 = scmp.eq.s32.totalorder %s17, 0
    %p132 = por %p130, %p131
    %p133 = scmp.ne.s32.totalorder %s119, %s120
    %p134 = scmp.eq.s32.totalorder %s18, 1
    %p135 = por %p133, %p134
    %p137 = scmp.ne.s32.totalorder %s120, %s136
    %p138 = scmp.eq.s32.totalorder %s18, 0
    %p139 = por %p137, %p138
    %s140 = ssub.s32 %s12, %s19
    %p141 = scmp.eq.s32.totalorder %s140, 0
    %s143 = sadd.s32 %s142, 1
    %s144 = scalar_select %p141, %s142, %s143
    %p147 = pneg %p141
    %p148 = scmp.eq.s32.totalorder %s12, 1
    %p149 = por %p147, %p148
    %p150 = scmp.ne.s32.totalorder %s142, %s145
    %p151 = scmp.eq.s32.totalorder %s12, 0
    %p152 = por %p150, %p151
    %p153 = scmp.ne.s32.totalorder %s142, %s145
    %p154 = scmp.eq.s32.totalorder %s17, 1
    %p155 = por %p153, %p154
    %p156 = scmp.ne.s32.totalorder %s145, %s146
    %p157 = scmp.eq.s32.totalorder %s17, 0
    %p158 = por %p156, %p157
    %p159 = scmp.ne.s32.totalorder %s145, %s146
    %p160 = scmp.eq.s32.totalorder %s18, 1
    %p161 = por %p159, %p160
    %p163 = scmp.ne.s32.totalorder %s146, %s162
    %p164 = scmp.eq.s32.totalorder %s18, 0
    %p165 = por %p163, %p164
    %p166 = scmp.le.s32.totalorder 1, %s12
    %p167 = scmp.lt.s32.totalorder %s12, 3
    %p168 = pnand %p166, %p167
    %p169 = pneg %p168
    // Predicated region
    $region9: #{tpu_custom_call.1} parent=5 // pred_check
      _
    $region10: #{tpu_custom_call.1} parent=5 // pred_check_branch
      %171 = sbr.rel (%p168) target = $region12
    $region11: #{tpu_custom_call.1} parent=5 // pred_region
      %s172 = ssub.s32 %s12, 1
      // Predicated region
      $region13: #{tpu_custom_call.1} parent=11 // pred_check
        %p173 = pneg %p59
      $region14: #{tpu_custom_call.1} parent=11 // pred_check_branch
        %175 = sbr.rel (%p173) target = $region16
      $region15: #{tpu_custom_call.1} parent=11 // pred_region
        _
      $region16: #{tpu_custom_call.1} parent=11 // pred_fallthru
        _
      // Predicated region
      $region17: #{tpu_custom_call.1} parent=11 // pred_check
        %p176 = pneg %p80
      $region18: #{tpu_custom_call.1} parent=11 // pred_check_branch
        %178 = sbr.rel (%p176) target = $region20
      $region19: #{tpu_custom_call.1} parent=11 // pred_region
        _
      $region20: #{tpu_custom_call.1} parent=11 // pred_fallthru
        _
    $region12: #{tpu_custom_call.1} parent=5 // pred_fallthru
      _
    %p179 = scmp.lt.s32.totalorder %s12, 2
    // Predicated region
    $region21: #{tpu_custom_call.1} parent=5 // pred_check
      %p180 = pneg %p179
    $region22: #{tpu_custom_call.1} parent=5 // pred_check_branch
      %182 = sbr.rel (%p180) target = $region24
    $region23: #{tpu_custom_call.1} parent=5 // pred_region
      // Predicated region
      $region25: #{tpu_custom_call.1} parent=23 // pred_check
        %p183 = pneg %p32
      $region26: #{tpu_custom_call.1} parent=23 // pred_check_branch
        %185 = sbr.rel (%p183) target = $region28
      $region27: #{tpu_custom_call.1} parent=23 // pred_region
        %s186 = smul.u32 16, %s12
        %p187 = scmp.lt.s32.totalorder %s186, 31
        %s188 = scalar_select %p187, %s186, 31
        %s189 = smul.addr %s188, 8
        %s190 = scalar_lea.vmem %s0, %s189
        %s191 = smul.u32 16, %s12
      $region28: #{tpu_custom_call.1} parent=23 // pred_fallthru
        _
    $region24: #{tpu_custom_call.1} parent=5 // pred_fallthru
      _
    %p192 = scmp.le.s32.totalorder 1, %s12
    %p193 = scmp.lt.s32.totalorder %s12, 3
    %p194 = pnand %p192, %p193
    %p195 = pneg %p194
    // Predicated region
    $region29: #{tpu_custom_call.1} parent=5 // pred_check
      _
    $region30: #{tpu_custom_call.1} parent=5 // pred_check_branch
      %197 = sbr.rel (%p194) target = $region32
    $region31: #{tpu_custom_call.1} parent=5 // pred_region
      %s198 = ssub.s32 %s12, 1
      %s199 = smul.u32 16, %s17
      %p200 = scmp.lt.s32.totalorder %s199, 31
      %s201 = scalar_select %p200, %s199, 31
      %s202 = smul.addr %s201, 8
      %s203 = scalar_lea.vmem %s0, %s202
      %p204 = pneg %p38
      %p205 = pneg %p35
      %p206 = pneg %p59
      %p207 = pneg %p56
      %p208 = pneg %p80
      %p209 = pneg %p77
      %p210 = pneg %p106
      %p211 = pneg %p103
      %s212 = smul.u32 16, %s17
      %p213 = scmp.lt.s32.totalorder %s212, 31
      %s214 = scalar_select %p213, %s212, 31
      %s215 = smul.addr %s214, 8
      %s216 = scalar_lea.vmem %s3, %s215
      %p217 = pneg %p132
      %p218 = pneg %p129
      %s219 = smul.u32 16, %s17
      %p220 = scmp.lt.s32.totalorder %s219, 31
      %s221 = scalar_select %p220, %s219, 31
      %s222 = smul.addr %s221, 8
      %s223 = scalar_lea.vmem %s4, %s222
      %p224 = pneg %p158
      %p225 = pneg %p155
      %s226 = smul.u32 16, %s17
      %p227 = scmp.lt.s32.totalorder %s226, 31
      %s228 = scalar_select %p227, %s226, 31
      %s229 = smul.addr %s228, 8
      %s230 = scalar_lea.vmem %s5, %s229
      %s231 = smul.u32 16, %s17
      %p232 = scmp.lt.s32.totalorder %s231, 31
      %s233 = scalar_select %p232, %s231, 31
      %s234 = smul.addr %s233, 8
      %s235 = scalar_lea.vmem %s0, %s234
      %s236 = smul.u32 16, %s17
      %s237 = smul.u32 16, %s17
      %p238 = scmp.lt.s32.totalorder %s237, 31
      %s239 = scalar_select %p238, %s237, 31
      %s240 = smul.addr %s239, 8
      %s241 = scalar_lea.vmem %s3, %s240
      %s242 = smul.u32 16, %s17
      %s243 = smul.u32 16, %s17
      %p244 = scmp.lt.s32.totalorder %s243, 31
      %s245 = scalar_select %p244, %s243, 31
      %s246 = smul.addr %s245, 8
      %s247 = scalar_lea.vmem %s4, %s246
      %s248 = smul.u32 16, %s17
      %s249 = smul.u32 16, %s17
      %p250 = scmp.lt.s32.totalorder %s249, 31
      %s251 = scalar_select %p250, %s249, 31
      %s252 = smul.addr %s251, 8
      %s253 = scalar_lea.vmem %s5, %s252
      %s254 = smul.u32 16, %s17
      %v255 = vld [vmem:[%s235] sm:$0xff]
      %v256 = vld [vmem:[%s235 + $0x8] sm:$0xff]
      %v257 = vld [vmem:[%s235 + $0x10] sm:$0xff]
      %v258 = vld [vmem:[%s235 + $0x18] sm:$0xff]
      %v259 = vld [vmem:[%s235 + $0x20] sm:$0xff]
      %v260 = vld [vmem:[%s235 + $0x28] sm:$0xff]
      %v261 = vld [vmem:[%s235 + $0x30] sm:$0xff]
      %v262 = vld [vmem:[%s235 + $0x38] sm:$0xff]
      %v263 = vld [vmem:[%s235 + $0x40] sm:$0xff]
      %v264 = vld [vmem:[%s235 + $0x48] sm:$0xff]
      %v265 = vld [vmem:[%s235 + $0x50] sm:$0xff]
      %v266 = vld [vmem:[%s235 + $0x58] sm:$0xff]
      %v267 = vld [vmem:[%s235 + $0x60] sm:$0xff]
      %v268 = vld [vmem:[%s235 + $0x68] sm:$0xff]
      %v269 = vld [vmem:[%s235 + $0x70] sm:$0xff]
      %v270 = vld [vmem:[%s235 + $0x78] sm:$0xff]
      %v271 = vld [vmem:[%s1] sm:$0xff]
      %v272 = vld [vmem:[%s1 + $0x8] sm:$0xff]
      %v273 = vld [vmem:[%s1 + $0x10] sm:$0xff]
      %v274 = vld [vmem:[%s1 + $0x18] sm:$0xff]
      %v275 = vld [vmem:[%s2] sm:$0x1]
      %v277 = vlaneseq
      %v278 = vshrl.u32 %v277, 7
      %v279 = vsub.s32 0, %v278
      %v280 = vrot.slane %v275, %v279
      %vm282 = vcmask 261120
      %v284 = vsel %vm282, %v255, 0
      %v287 = vsel %vm282, %v256, 0
      %v290 = vsel %vm282, %v257, 0
      %v293 = vsel %vm282, %v258, 0
      %v296 = vsel %vm282, %v259, 0
      %v299 = vsel %vm282, %v260, 0
      %v302 = vsel %vm282, %v261, 0
      %v305 = vsel %vm282, %v262, 0
      %v308 = vsel %vm282, %v263, 0
      %v311 = vsel %vm282, %v264, 0
      %v314 = vsel %vm282, %v265, 0
      %v317 = vsel %vm282, %v266, 0
      %v320 = vsel %vm282, %v267, 0
      %v323 = vsel %vm282, %v268, 0
      %v326 = vsel %vm282, %v269, 0
      %v329 = vsel %vm282, %v270, 0
      %331 = vmatprep.subr.mxu0 0.0
      %332 = vmatpush1.msra.mxu0 0.0
      %333 = vmatprep.subr.mxu0 0.0
      %334 = vmatpush1.msra.mxu0 0.0
      %335 = vmatprep.subr.mxu0 0.0
      %336 = vmatpush1.msra.mxu0 0.0
      %337 = vmatprep.subr.mxu0 0.0
      %338 = vmatpush1.msra.mxu0 0.0
      %339 = vmatprep.subr.mxu0 0.0
      %340 = vmatpush1.msra.mxu0 0.0
      %341 = vmatprep.subr.mxu0 0.0
      %342 = vmatpush1.msra.mxu0 0.0
      %343 = vmatprep.subr.mxu0 0.0
      %344 = vmatpush1.msra.mxu0 0.0
      %345 = vmatprep.subr.mxu0 0.0
      %346 = vmatpush1.msra.mxu0 0.0
      %347 = vmatprep.subr.mxu0 0.0
      %348 = vmatpush1.msra.mxu0 0.0
      %349 = vmatprep.subr.mxu0 0.0
      %350 = vmatpush1.msra.mxu0 0.0
      %351 = vmatprep.subr.mxu0 0.0
      %352 = vmatpush1.msra.mxu0 0.0
      %353 = vmatprep.subr.mxu0 0.0
      %354 = vmatpush1.msra.mxu0 0.0
      %355 = vmatprep.subr.mxu0 0.0
      %356 = vmatpush1.msra.mxu0 %v274
      %357 = vmatprep.subr.mxu0 0.0
      %358 = vmatpush1.msra.mxu0 %v273
      %359 = vmatprep.subr.mxu0 0.0
      %360 = vmatpush1.msra.mxu0 %v272
      %361 = vmatprep.subr.mxu0 0.0
      %362 = vmatpush1.msra.mxu0 %v271
      %363 = vmatprep.subr.mxu0 0.0
      %364 = vmatpush2.msra.mxu0 0.0
      %365 = vmatprep.subr.mxu0 0.0
      %366 = vmatpush2.msra.mxu0 0.0
      %367 = vmatprep.subr.mxu0 0.0
      %368 = vmatpush2.msra.mxu0 0.0
      %369 = vmatprep.subr.mxu0 0.0
      %370 = vmatpush2.msra.mxu0 0.0
      %371 = vmatprep.subr.mxu0 0.0
      %372 = vmatpush2.msra.mxu0 0.0
      %373 = vmatprep.subr.mxu0 0.0
      %374 = vmatpush2.msra.mxu0 0.0
      %375 = vmatprep.subr.mxu0 0.0
      %376 = vmatpush2.msra.mxu0 0.0
      %377 = vmatprep.subr.mxu0 0.0
      %378 = vmatpush2.msra.mxu0 0.0
      %379 = vmatprep.subr.mxu0 0.0
      %380 = vmatpush2.msra.mxu0 0.0
      %381 = vmatprep.subr.mxu0 0.0
      %382 = vmatpush2.msra.mxu0 0.0
      %383 = vmatprep.subr.mxu0 0.0
      %384 = vmatpush2.msra.mxu0 0.0
      %385 = vmatprep.subr.mxu0 0.0
      %386 = vmatpush2.msra.mxu0 0.0
      %387 = vmatprep.subr.mxu0 0.0
      %388 = vmatpush2.msra.mxu0 0.0
      %389 = vmatprep.subr.mxu0 0.0
      %390 = vmatpush2.msra.mxu0 0.0
      %391 = vmatprep.subr.mxu0 0.0
      %392 = vmatpush2.msra.mxu0 0.0
      %393 = vmatprep.subr.mxu0 0.0
      %394 = vmatpush2.msra.mxu0 0.0
      %395 = vmatprep.mubr.f32.mxu0 0.0
      %396 = vmatmul.mubr.f32.gmra.mxu0 %v284
      %v397 = vpop.f32.mrf.mxu0
      %v398 = vadd.f32 %v280, %v397
      %v399 = vpop.f32.mrf.mxu0
      %400 = vmatprep.mubr.f32.mxu0 0.0
      %401 = vmatmul.mubr.f32.gmra.mxu0 %v287
      %v402 = vpop.f32.mrf.mxu0
      %v403 = vadd.f32 %v280, %v402
      %v404 = vpop.f32.mrf.mxu0
      %405 = vmatprep.mubr.f32.mxu0 0.0
      %406 = vmatmul.mubr.f32.gmra.mxu0 %v290
      %v407 = vpop.f32.mrf.mxu0
      %v408 = vadd.f32 %v280, %v407
      %v409 = vpop.f32.mrf.mxu0
      %410 = vmatprep.mubr.f32.mxu0 0.0
      %411 = vmatmul.mubr.f32.gmra.mxu0 %v293
      %v412 = vpop.f32.mrf.mxu0
      %v413 = vadd.f32 %v280, %v412
      %v414 = vpop.f32.mrf.mxu0
      %415 = vmatprep.mubr.f32.mxu0 0.0
      %416 = vmatmul.mubr.f32.gmra.mxu0 %v296
      %v417 = vpop.f32.mrf.mxu0
      %v418 = vadd.f32 %v280, %v417
      %v419 = vpop.f32.mrf.mxu0
      %420 = vmatprep.mubr.f32.mxu0 0.0
      %421 = vmatmul.mubr.f32.gmra.mxu0 %v299
      %v422 = vpop.f32.mrf.mxu0
      %v423 = vadd.f32 %v280, %v422
      %v424 = vpop.f32.mrf.mxu0
      %425 = vmatprep.mubr.f32.mxu0 0.0
      %426 = vmatmul.mubr.f32.gmra.mxu0 %v302
      %v427 = vpop.f32.mrf.mxu0
      %v428 = vadd.f32 %v280, %v427
      %v429 = vpop.f32.mrf.mxu0
      %430 = vmatprep.mubr.f32.mxu0 0.0
      %431 = vmatmul.mubr.f32.gmra.mxu0 %v305
      %v432 = vpop.f32.mrf.mxu0
      %v433 = vadd.f32 %v280, %v432
      %v434 = vpop.f32.mrf.mxu0
      %435 = vmatprep.mubr.f32.mxu0 0.0
      %436 = vmatmul.mubr.f32.gmra.mxu0 %v308
      %v437 = vpop.f32.mrf.mxu0
      %v438 = vadd.f32 %v280, %v437
      %v439 = vpop.f32.mrf.mxu0
      %440 = vmatprep.mubr.f32.mxu0 0.0
      %441 = vmatmul.mubr.f32.gmra.mxu0 %v311
      %v442 = vpop.f32.mrf.mxu0
      %v443 = vadd.f32 %v280, %v442
      %v444 = vpop.f32.mrf.mxu0
      %445 = vmatprep.mubr.f32.mxu0 0.0
      %446 = vmatmul.mubr.f32.gmra.mxu0 %v314
      %v447 = vpop.f32.mrf.mxu0
      %v448 = vadd.f32 %v280, %v447
      %v449 = vpop.f32.mrf.mxu0
      %450 = vmatprep.mubr.f32.mxu0 0.0
      %451 = vmatmul.mubr.f32.gmra.mxu0 %v317
      %v452 = vpop.f32.mrf.mxu0
      %v453 = vadd.f32 %v280, %v452
      %v454 = vpop.f32.mrf.mxu0
      %455 = vmatprep.mubr.f32.mxu0 0.0
      %456 = vmatmul.mubr.f32.gmra.mxu0 %v320
      %v457 = vpop.f32.mrf.mxu0
      %v458 = vadd.f32 %v280, %v457
      %v459 = vpop.f32.mrf.mxu0
      %460 = vmatprep.mubr.f32.mxu0 0.0
      %461 = vmatmul.mubr.f32.gmra.mxu0 %v323
      %v462 = vpop.f32.mrf.mxu0
      %v463 = vadd.f32 %v280, %v462
      %v464 = vpop.f32.mrf.mxu0
      %465 = vmatprep.mubr.f32.mxu0 0.0
      %466 = vmatmul.mubr.f32.gmra.mxu0 %v326
      %v467 = vpop.f32.mrf.mxu0
      %v468 = vadd.f32 %v280, %v467
      %v469 = vpop.f32.mrf.mxu0
      %470 = vmatprep.mubr.f32.mxu0 0.0
      %471 = vmatmul.mubr.f32.gmra.mxu0 %v329
      %v472 = vpop.f32.mrf.mxu0
      %v473 = vadd.f32 %v280, %v472
      %v474 = vpop.f32.mrf.mxu0
      %475 = vdwg.mxu0
      %476 = vst.msk [vmem:[%s241] sm:$0xff] %vm282, %v398
      %477 = vst.msk [vmem:[%s241 + $0x8] sm:$0xff] %vm282, %v403
      %478 = vst.msk [vmem:[%s241 + $0x10] sm:$0xff] %vm282, %v408
      %479 = vst.msk [vmem:[%s241 + $0x18] sm:$0xff] %vm282, %v413
      %480 = vst.msk [vmem:[%s241 + $0x20] sm:$0xff] %vm282, %v418
      %481 = vst.msk [vmem:[%s241 + $0x28] sm:$0xff] %vm282, %v423
      %482 = vst.msk [vmem:[%s241 + $0x30] sm:$0xff] %vm282, %v428
      %483 = vst.msk [vmem:[%s241 + $0x38] sm:$0xff] %vm282, %v433
      %484 = vst.msk [vmem:[%s241 + $0x40] sm:$0xff] %vm282, %v438
      %485 = vst.msk [vmem:[%s241 + $0x48] sm:$0xff] %vm282, %v443
      %486 = vst.msk [vmem:[%s241 + $0x50] sm:$0xff] %vm282, %v448
      %487 = vst.msk [vmem:[%s241 + $0x58] sm:$0xff] %vm282, %v453
      %488 = vst.msk [vmem:[%s241 + $0x60] sm:$0xff] %vm282, %v458
      %489 = vst.msk [vmem:[%s241 + $0x68] sm:$0xff] %vm282, %v463
      %490 = vst.msk [vmem:[%s241 + $0x70] sm:$0xff] %vm282, %v468
      %491 = vst.msk [vmem:[%s241 + $0x78] sm:$0xff] %vm282, %v473
      %508 = vrot.lane.b32.xlu0 %v398, 96
      %v509 = vpop.permute.xlu0 %508
      %510 = vrot.lane.b32.xlu0 %v403, 96
      %v511 = vpop.permute.xlu0 %510
      %512 = vrot.lane.b32.xlu0 %v408, 96
      %v513 = vpop.permute.xlu0 %512
      %514 = vrot.lane.b32.xlu0 %v413, 96
      %v515 = vpop.permute.xlu0 %514
      %516 = vrot.lane.b32.xlu0 %v418, 96
      %v517 = vpop.permute.xlu0 %516
      %518 = vrot.lane.b32.xlu0 %v423, 96
      %v519 = vpop.permute.xlu0 %518
      %520 = vrot.lane.b32.xlu0 %v428, 96
      %v521 = vpop.permute.xlu0 %520
      %522 = vrot.lane.b32.xlu0 %v433, 96
      %v523 = vpop.permute.xlu0 %522
      %524 = vrot.lane.b32.xlu0 %v438, 96
      %v525 = vpop.permute.xlu0 %524
      %526 = vrot.lane.b32.xlu0 %v443, 96
      %v527 = vpop.permute.xlu0 %526
      %528 = vrot.lane.b32.xlu0 %v448, 96
      %v529 = vpop.permute.xlu0 %528
      %530 = vrot.lane.b32.xlu0 %v453, 96
      %v531 = vpop.permute.xlu0 %530
      %532 = vrot.lane.b32.xlu0 %v458, 96
      %v533 = vpop.permute.xlu0 %532
      %534 = vrot.lane.b32.xlu0 %v463, 96
      %v535 = vpop.permute.xlu0 %534
      %536 = vrot.lane.b32.xlu0 %v468, 96
      %v537 = vpop.permute.xlu0 %536
      %538 = vrot.lane.b32.xlu0 %v473, 96
      %v539 = vpop.permute.xlu0 %538
      %556 = vst.msk [vmem:[%s247] sm:$0xff] %vm282, %v509
      %557 = vst.msk [vmem:[%s247 + $0x8] sm:$0xff] %vm282, %v511
      %558 = vst.msk [vmem:[%s247 + $0x10] sm:$0xff] %vm282, %v513
      %559 = vst.msk [vmem:[%s247 + $0x18] sm:$0xff] %vm282, %v515
      %560 = vst.msk [vmem:[%s247 + $0x20] sm:$0xff] %vm282, %v517
      %561 = vst.msk [vmem:[%s247 + $0x28] sm:$0xff] %vm282, %v519
      %562 = vst.msk [vmem:[%s247 + $0x30] sm:$0xff] %vm282, %v521
      %563 = vst.msk [vmem:[%s247 + $0x38] sm:$0xff] %vm282, %v523
      %564 = vst.msk [vmem:[%s247 + $0x40] sm:$0xff] %vm282, %v525
      %565 = vst.msk [vmem:[%s247 + $0x48] sm:$0xff] %vm282, %v527
      %566 = vst.msk [vmem:[%s247 + $0x50] sm:$0xff] %vm282, %v529
      %567 = vst.msk [vmem:[%s247 + $0x58] sm:$0xff] %vm282, %v531
      %568 = vst.msk [vmem:[%s247 + $0x60] sm:$0xff] %vm282, %v533
      %569 = vst.msk [vmem:[%s247 + $0x68] sm:$0xff] %vm282, %v535
      %570 = vst.msk [vmem:[%s247 + $0x70] sm:$0xff] %vm282, %v537
      %571 = vst.msk [vmem:[%s247 + $0x78] sm:$0xff] %vm282, %v539
      %572 = vrot.lane.b32.xlu0 %v398, 64
      %v573 = vpop.permute.xlu0 %572
      %574 = vrot.lane.b32.xlu0 %v403, 64
      %v575 = vpop.permute.xlu0 %574
      %576 = vrot.lane.b32.xlu0 %v408, 64
      %v577 = vpop.permute.xlu0 %576
      %578 = vrot.lane.b32.xlu0 %v413, 64
      %v579 = vpop.permute.xlu0 %578
      %580 = vrot.lane.b32.xlu0 %v418, 64
      %v581 = vpop.permute.xlu0 %580
      %582 = vrot.lane.b32.xlu0 %v423, 64
      %v583 = vpop.permute.xlu0 %582
      %584 = vrot.lane.b32.xlu0 %v428, 64
      %v585 = vpop.permute.xlu0 %584
      %586 = vrot.lane.b32.xlu0 %v433, 64
      %v587 = vpop.permute.xlu0 %586
      %588 = vrot.lane.b32.xlu0 %v438, 64
      %v589 = vpop.permute.xlu0 %588
      %590 = vrot.lane.b32.xlu0 %v443, 64
      %v591 = vpop.permute.xlu0 %590
      %592 = vrot.lane.b32.xlu0 %v448, 64
      %v593 = vpop.permute.xlu0 %592
      %594 = vrot.lane.b32.xlu0 %v453, 64
      %v595 = vpop.permute.xlu0 %594
      %596 = vrot.lane.b32.xlu0 %v458, 64
      %v597 = vpop.permute.xlu0 %596
      %598 = vrot.lane.b32.xlu0 %v463, 64
      %v599 = vpop.permute.xlu0 %598
      %600 = vrot.lane.b32.xlu0 %v468, 64
      %v601 = vpop.permute.xlu0 %600
      %602 = vrot.lane.b32.xlu0 %v473, 64
      %v603 = vpop.permute.xlu0 %602
      %vm620 = vcmask 293888
      %621 = vst.msk [vmem:[%s253] sm:$0xff] %vm620, %v573
      %622 = vst.msk [vmem:[%s253 + $0x8] sm:$0xff] %vm620, %v575
      %623 = vst.msk [vmem:[%s253 + $0x10] sm:$0xff] %vm620, %v577
      %624 = vst.msk [vmem:[%s253 + $0x18] sm:$0xff] %vm620, %v579
      %625 = vst.msk [vmem:[%s253 + $0x20] sm:$0xff] %vm620, %v581
      %626 = vst.msk [vmem:[%s253 + $0x28] sm:$0xff] %vm620, %v583
      %627 = vst.msk [vmem:[%s253 + $0x30] sm:$0xff] %vm620, %v585
      %628 = vst.msk [vmem:[%s253 + $0x38] sm:$0xff] %vm620, %v587
      %629 = vst.msk [vmem:[%s253 + $0x40] sm:$0xff] %vm620, %v589
      %630 = vst.msk [vmem:[%s253 + $0x48] sm:$0xff] %vm620, %v591
      %631 = vst.msk [vmem:[%s253 + $0x50] sm:$0xff] %vm620, %v593
      %632 = vst.msk [vmem:[%s253 + $0x58] sm:$0xff] %vm620, %v595
      %633 = vst.msk [vmem:[%s253 + $0x60] sm:$0xff] %vm620, %v597
      %634 = vst.msk [vmem:[%s253 + $0x68] sm:$0xff] %vm620, %v599
      %635 = vst.msk [vmem:[%s253 + $0x70] sm:$0xff] %vm620, %v601
      %636 = vst.msk [vmem:[%s253 + $0x78] sm:$0xff] %vm620, %v603
      %s637 = smul.u32 16, %s17
      %p638 = scmp.lt.s32.totalorder %s637, 31
      %s639 = scalar_select %p638, %s637, 31
      %s640 = smul.addr %s639, 8
      %s641 = scalar_lea.vmem %s3, %s640
      %s642 = smul.u32 16, %s17
      %p643 = scmp.lt.s32.totalorder %s642, 31
      %s644 = scalar_select %p643, %s642, 31
      %s645 = smul.addr %s644, 8
      %s646 = scalar_lea.vmem %s4, %s645
      %s647 = smul.u32 16, %s17
      %p648 = scmp.lt.s32.totalorder %s647, 31
      %s649 = scalar_select %p648, %s647, 31
      %s650 = smul.addr %s649, 8
      %s651 = scalar_lea.vmem %s5, %s650
      // Predicated region
      $region33: #{tpu_custom_call.1} parent=31 // pred_check
        %p652 = pneg %p103
      $region34: #{tpu_custom_call.1} parent=31 // pred_check_branch
        %654 = sbr.rel (%p652) target = $region36
      $region35: #{tpu_custom_call.1} parent=31 // pred_region
        %s655 = smul.u32 16, %s17
      $region36: #{tpu_custom_call.1} parent=31 // pred_fallthru
        _
      // Predicated region
      $region37: #{tpu_custom_call.1} parent=31 // pred_check
        %p656 = pneg %p129
      $region38: #{tpu_custom_call.1} parent=31 // pred_check_branch
        %658 = sbr.rel (%p656) target = $region40
      $region39: #{tpu_custom_call.1} parent=31 // pred_region
        %s659 = smul.u32 16, %s17
      $region40: #{tpu_custom_call.1} parent=31 // pred_fallthru
        _
      // Predicated region
      $region41: #{tpu_custom_call.1} parent=31 // pred_check
        %p660 = pneg %p155
      $region42: #{tpu_custom_call.1} parent=31 // pred_check_branch
        %662 = sbr.rel (%p660) target = $region44
      $region43: #{tpu_custom_call.1} parent=31 // pred_region
        %s663 = smul.u32 16, %s17
      $region44: #{tpu_custom_call.1} parent=31 // pred_fallthru
        _
    $region32: #{tpu_custom_call.1} parent=5 // pred_fallthru
      _
    %p664 = scmp.le.s32.totalorder 2, %s12
    // Predicated region
    $region45: #{tpu_custom_call.1} parent=5 // pred_check
      %p665 = pneg %p664
    $region46: #{tpu_custom_call.1} parent=5 // pred_check_branch
      %667 = sbr.rel (%p665) target = $region48
    $region47: #{tpu_custom_call.1} parent=5 // pred_region
      %s668 = ssub.s32 %s12, 2
      // Predicated region
      $region49: #{tpu_custom_call.1} parent=47 // pred_check
        %p669 = pneg %p109
      $region50: #{tpu_custom_call.1} parent=47 // pred_check_branch
        %671 = sbr.rel (%p669) target = $region52
      $region51: #{tpu_custom_call.1} parent=47 // pred_region
        %s672 = smul.u32 16, %s18
        %p673 = scmp.lt.s32.totalorder %s672, 31
        %s674 = scalar_select %p673, %s672, 31
        %s675 = smul.addr %s674, 8
        %s676 = scalar_lea.vmem %s3, %s675
      $region52: #{tpu_custom_call.1} parent=47 // pred_fallthru
        _
      // Predicated region
      $region53: #{tpu_custom_call.1} parent=47 // pred_check
        %p677 = pneg %p135
      $region54: #{tpu_custom_call.1} parent=47 // pred_check_branch
        %679 = sbr.rel (%p677) target = $region56
      $region55: #{tpu_custom_call.1} parent=47 // pred_region
        %s680 = smul.u32 16, %s18
        %p681 = scmp.lt.s32.totalorder %s680, 31
        %s682 = scalar_select %p681, %s680, 31
        %s683 = smul.addr %s682, 8
        %s684 = scalar_lea.vmem %s4, %s683
      $region56: #{tpu_custom_call.1} parent=47 // pred_fallthru
        _
      // Predicated region
      $region57: #{tpu_custom_call.1} parent=47 // pred_check
        %p685 = pneg %p161
      $region58: #{tpu_custom_call.1} parent=47 // pred_check_branch
        %687 = sbr.rel (%p685) target = $region60
      $region59: #{tpu_custom_call.1} parent=47 // pred_region
        %s688 = smul.u32 16, %s18
        %p689 = scmp.lt.s32.totalorder %s688, 31
        %s690 = scalar_select %p689, %s688, 31
        %s691 = smul.addr %s690, 8
        %s692 = scalar_lea.vmem %s5, %s691
      $region60: #{tpu_custom_call.1} parent=47 // pred_fallthru
        _
    $region48: #{tpu_custom_call.1} parent=5 // pred_fallthru
      _
  $region6: #{tpu_custom_call.1} parent=0 // loop_footer
    %s16 = sadd.s32 1, %s12
  $region7: #{tpu_custom_call.1} parent=0 // loop_footer_branch
    %11 = sbr.rel target = $region3
  $region8: #{tpu_custom_call.1} parent=0 // loop_exit
    _

</llo_original>
